<compile_context>
chip_gen: v6e
topology: v6e:2x2x1
jax: 0.10.0
libtpu: 0.0.40
codegen_flags: <defaults>
</compile_context>

<pallas_src>
import functools

import jax
import jax.numpy as jnp
from jax.experimental import pallas as pl
from jax.experimental.pallas import tpu as pltpu

LANE = 128


def _pick_tile(dim, candidates):
    """Largest candidate that divides `dim`, else the full extent (always legal)."""
    for c in candidates:
        if dim % c == 0:
            return c
    return dim


def mlp_kernel(x_ref, w1t_ref, w2t_ref, o_ref, acc_ref):
    # x_ref:   (bm, in_dim)   batch tile
    # w1t_ref: (in_dim, bk)   fc1 weight tile (transposed, hidden-sliced)
    # w2t_ref: (bk, bn)       fc2 weight tile (transposed, hidden x out sliced)
    # o_ref:   (bm, bn)       output tile
    # acc_ref: (bm, bn) f32   accumulator across the hidden (K) grid axis
    k = pl.program_id(2)

    @pl.when(k == 0)
    def _():
        acc_ref[...] = jnp.zeros_like(acc_ref)

    # (bm, bk) hidden tile: ReLU is elementwise over hidden, so applying it per
    # K-tile and summing the second matmul over K is exact.
    h = jnp.dot(x_ref[...], w1t_ref[...], preferred_element_type=jnp.float32)
    h = jnp.maximum(h, 0.0)

    acc_ref[...] += jnp.dot(h.astype(w2t_ref.dtype), w2t_ref[...],
                            preferred_element_type=jnp.float32)

    @pl.when(k == pl.num_programs(2) - 1)
    def _():
        o_ref[...] = acc_ref[...].astype(o_ref.dtype)


def prepare_mlp_weights(w1, w2, *, param_dtype=None):
    """One-time weight prep (outside the per-call hot path).

    w1: (hidden, in_dim), w2: (out_dim, hidden)  -- PyTorch nn.Linear layout.
    Returns (w1t, w2t_padded, out_dim):
      w1t : (in_dim, hidden)
      w2t : (hidden, out_dim_padded)  with out_dim padded to a multiple of 128
    so kernel stores are lane-dense and no transpose runs per forward call.
    """
    w1t = jnp.asarray(w1).T
    w2t = jnp.asarray(w2).T
    out_dim = w2t.shape[1]
    pad = (-out_dim) % LANE
    if pad:
        w2t = jnp.pad(w2t, ((0, 0), (0, pad)))
    if param_dtype is not None:
        w1t = w1t.astype(param_dtype)
        w2t = w2t.astype(param_dtype)
    return w1t, w2t, out_dim


@functools.partial(jax.jit, static_argnames=("out_dim", "bm", "bn", "bk"))
def mlp_forward_prepared(x, w1t, w2t, *, out_dim, bm=None, bn=None, bk=None):
    """x: (B, in_dim); w1t: (in_dim, hidden); w2t: (hidden, out_dim_padded)."""
    B, in_dim = x.shape
    in_dim2, hidden = w1t.shape
    hidden2, n_pad = w2t.shape
    assert in_dim == in_dim2 and hidden == hidden2

    # --- tile selection -------------------------------------------------
    if bm is None:
        bm = _pick_tile(B, (512, 256, 128, 64, 32, 16, 8))
    if bn is None:
        bn = _pick_tile(n_pad, (256, 128))
    if bk is None:
        bk = _pick_tile(hidden, (512, 256, 128))
    assert B % bm == 0 and n_pad % bn == 0 and hidden % bk == 0
    # TODO(synk): if in_dim itself is huge, add a fourth reduction tile over in_dim.

    grid = (B // bm, n_pad // bn, hidden // bk)

    out_padded = pl.pallas_call(
        mlp_kernel,
        out_shape=jax.ShapeDtypeStruct((B, n_pad), x.dtype),
        grid_spec=pltpu.PrefetchScalarGridSpec(
            num_scalar_prefetch=0,
            grid=grid,
            in_specs=[
                pl.BlockSpec((bm, in_dim), lambda i, j, k: (i, 0)),   # x batch tile
                pl.BlockSpec((in_dim, bk), lambda i, j, k: (0, k)),   # fc1^T hidden tile
                pl.BlockSpec((bk, bn),     lambda i, j, k: (k, j)),   # fc2^T (hidden,out) tile
            ],
            out_specs=pl.BlockSpec((bm, bn), lambda i, j, k: (i, j)),
            scratch_shapes=[pltpu.VMEM((bm, bn), jnp.float32)],
        ),
        compiler_params=pltpu.CompilerParams(
            dimension_semantics=("parallel", "parallel", "arbitrary"),
            vmem_limit_bytes=48 * 1024 * 1024,   # safe on v5e/v6e (128 MiB) and v7x (64 MiB)
        ),
    )(x, w1t, w2t)

    if n_pad != out_dim:
        out_padded = out_padded[:, :out_dim]
    return out_padded


def mlp_forward(x, w1, w2, *, param_dtype=None):
    """Convenience wrapper taking PyTorch-layout weights directly."""
    w1t, w2t, out_dim = prepare_mlp_weights(w1, w2, param_dtype=param_dtype)
    if param_dtype is not None:
        x = x.astype(param_dtype)
    return mlp_forward_prepared(x, w1t, w2t, out_dim=out_dim)


if __name__ == "__main__":
    # Small shapes consistent with the module: B=16, in_dim=32, hidden=64, out_dim=32
    B, in_dim, hidden_dim, out_dim = 16, 32, 64, 32

    key = jax.random.PRNGKey(0)
    kx, k1, k2 = jax.random.split(key, 3)

    x = jax.random.normal(kx, (B, in_dim), dtype=jnp.float32)
    # PyTorch weight layout: [out_features, in_features]
    w1 = jax.random.normal(k1, (hidden_dim, in_dim), dtype=jnp.float32) * (1.0 / in_dim ** 0.5)
    w2 = jax.random.normal(k2, (out_dim, hidden_dim), dtype=jnp.float32) * (1.0 / hidden_dim ** 0.5)

    # One-time prep (transpose + lane-pad) outside the hot path, then forward.
    w1t, w2t, od = prepare_mlp_weights(w1, w2)
    y = mlp_forward_prepared(x, w1t, w2t, out_dim=od)
    y = jax.block_until_ready(y)

    # Reference check in plain JAX (same math as the PyTorch module)
    y_ref = jnp.maximum(x @ w1.T, 0.0) @ w2.T
    assert y.shape == (B, out_dim)
    assert jnp.allclose(y, y_ref, atol=1e-5, rtol=1e-5)

    print("KERNEL_OK")
</pallas_src>

<mosaic_0001>
module attributes {stable_mosaic.version = 11 : i64} {
  func.func @mlp_kernel(%arg0: i32, %arg1: i32, %arg2: i32, %arg3: memref<16x32xf32, #tpu.memory_space<vmem>>, %arg4: memref<32x64xf32, #tpu.memory_space<vmem>>, %arg5: memref<64x128xf32, #tpu.memory_space<vmem>>, %arg6: memref<16x128xf32, #tpu.memory_space<vmem>>, %arg7: memref<16x128xf32, #tpu.memory_space<vmem>>) attributes {dimension_semantics = [#tpu.dimension_semantics<parallel>, #tpu.dimension_semantics<parallel>, #tpu.dimension_semantics<arbitrary>], iteration_bounds = array<i64: 1, 1, 1>, scalar_prefetch = 0 : i64, scratch_operands = 1 : i64, tpu.core_type = #tpu.core_type<tc>, window_params = [{transform_indices = @transform_0, window_bounds = array<i64: 16, 32>}, {transform_indices = @transform_1, window_bounds = array<i64: 32, 64>}, {transform_indices = @transform_2, window_bounds = array<i64: 64, 128>}, {transform_indices = @transform_3, window_bounds = array<i64: 16, 128>}]} {
    %c0_i32 = arith.constant 0 : i32
    %0 = arith.cmpi eq, %arg2, %c0_i32 : i32
    %1 = arith.extui %0 : i1 to i32
    %c0_i32_0 = arith.constant 0 : i32
    %2 = arith.cmpi ne, %1, %c0_i32_0 : i32
    scf.if %2 {
      %cst_14 = arith.constant 0.000000e+00 : f32
      %16 = vector.broadcast %cst_14 : f32 to vector<16x128xf32>
      %c0_15 = arith.constant 0 : index
      %c0_16 = arith.constant 0 : index
      %17 = vector.load %arg7[%c0_15, %c0_16] : memref<16x128xf32, #tpu.memory_space<vmem>>, vector<16x128xf32>
      tpu.vector_store %arg7[%c0_15, %c0_16], %16 {strides = array<i32>} : memref<16x128xf32, #tpu.memory_space<vmem>>, vector<16x128xf32>,
    } else {
    }
    %c0 = arith.constant 0 : index
    %c0_1 = arith.constant 0 : index
    %3 = vector.load %arg3[%c0, %c0_1] : memref<16x32xf32, #tpu.memory_space<vmem>>, vector<16x32xf32>
    %c0_2 = arith.constant 0 : index
    %c0_3 = arith.constant 0 : index
    %4 = vector.load %arg4[%c0_2, %c0_3] : memref<32x64xf32, #tpu.memory_space<vmem>>, vector<32x64xf32>
    %cst = arith.constant dense<0.000000e+00> : vector<16x64xf32>
    %5 = tpu.matmul %3, %4, %cst {dimension_numbers = #tpu.dot_dimension_numbers<[1], [0], [0], [1], [0, 0, 1, 1], [], []>} : vector<16x32xf32>, vector<32x64xf32>, vector<16x64xf32> -> vector<16x64xf32>
    %cst_4 = arith.constant 0.000000e+00 : f32
    %6 = vector.broadcast %cst_4 : f32 to vector<16x64xf32>
    %7 = arith.maximumf %5, %6 : vector<16x64xf32>
    %c0_5 = arith.constant 0 : index
    %c0_6 = arith.constant 0 : index
    %8 = vector.load %arg7[%c0_5, %c0_6] : memref<16x128xf32, #tpu.memory_space<vmem>>, vector<16x128xf32>
    %c0_7 = arith.constant 0 : index
    %c0_8 = arith.constant 0 : index
    %9 = vector.load %arg5[%c0_7, %c0_8] : memref<64x128xf32, #tpu.memory_space<vmem>>, vector<64x128xf32>
    %cst_9 = arith.constant dense<0.000000e+00> : vector<16x128xf32>
    %10 = tpu.matmul %7, %9, %cst_9 {dimension_numbers = #tpu.dot_dimension_numbers<[1], [0], [0], [1], [0, 0, 1, 1], [], []>} : vector<16x64xf32>, vector<64x128xf32>, vector<16x128xf32> -> vector<16x128xf32>
    %11 = arith.addf %8, %10 : vector<16x128xf32>
    %c0_10 = arith.constant 0 : index
    %c0_11 = arith.constant 0 : index
    %12 = vector.load %arg7[%c0_10, %c0_11] : memref<16x128xf32, #tpu.memory_space<vmem>>, vector<16x128xf32>
    tpu.vector_store %arg7[%c0_10, %c0_11], %11 {strides = array<i32>} : memref<16x128xf32, #tpu.memory_space<vmem>>, vector<16x128xf32>,
    %c0_i32_12 = arith.constant 0 : i32
    %13 = arith.cmpi eq, %arg2, %c0_i32_12 : i32
    %14 = arith.extui %13 : i1 to i32
    %c0_i32_13 = arith.constant 0 : i32
    %15 = arith.cmpi ne, %14, %c0_i32_13 : i32
    scf.if %15 {
      %c0_14 = arith.constant 0 : index
      %c0_15 = arith.constant 0 : index
      %16 = vector.load %arg7[%c0_14, %c0_15] : memref<16x128xf32, #tpu.memory_space<vmem>>, vector<16x128xf32>
      %c0_16 = arith.constant 0 : index
      %c0_17 = arith.constant 0 : index
      %17 = vector.load %arg6[%c0_16, %c0_17] : memref<16x128xf32, #tpu.memory_space<vmem>>, vector<16x128xf32>
      tpu.vector_store %arg6[%c0_16, %c0_17], %16 {strides = array<i32>} : memref<16x128xf32, #tpu.memory_space<vmem>>, vector<16x128xf32>,
    } else {
    }
    return
  }
  func.func @transform_0(%arg0: i32, %arg1: i32, %arg2: i32) -> (i32, i32) {
    %c0_i32 = arith.constant 0 : i32
    %c0_i32_0 = arith.constant 0 : i32
    return %arg0, %c0_i32 : i32, i32
  }
  func.func @transform_1(%arg0: i32, %arg1: i32, %arg2: i32) -> (i32, i32) {
    %c0_i32 = arith.constant 0 : i32
    %c0_i32_0 = arith.constant 0 : i32
    return %c0_i32, %arg2 : i32, i32
  }
  func.func @transform_2(%arg0: i32, %arg1: i32, %arg2: i32) -> (i32, i32) {
    %c0_i32 = arith.constant 0 : i32
    return %arg2, %arg1 : i32, i32
  }
  func.func @transform_3(%arg0: i32, %arg1: i32, %arg2: i32) -> (i32, i32) {
    %c0_i32 = arith.constant 0 : i32
    return %arg0, %arg1 : i32, i32
  }
}

</mosaic_0001>

<llo_original>
// kernel: mlp_forward_prepared.1
$region0: #{mlp_forward_prepared.1}
  #allocation0 [shape = 'u32[]', space=smem, size = 0x4, offset = 0x4, fixed_abs, tag = 'smem constant byte address 0x4 - core index']
  #allocation1 [shape = 'u32[144,128]{1,0:T(1,128)}', space=vmem, size = 0x12000, scoped, tag = 'internal scratch']
  #allocation2 [shape = 'f32[16,128]{1,0:T(8,128)}', space=vmem, size = 0x2000, scoped, tag = 'scratch operand']
  %s0 = inlined_call_operand.hbm [shape: f32[16,32], index: 0, kind: input, shape index: {}]
  %s1 = inlined_call_operand.hbm [shape: f32[32,64], index: 1, kind: input, shape index: {}]
  %s2 = inlined_call_operand.hbm [shape: f32[64,128], index: 2, kind: input, shape index: {}]
  %s3 = inlined_call_operand.hbm [shape: f32[16,128], index: 3, kind: output, shape index: {}]
  %s4 = sld [smem:[#allocation0]]
  $region42: #{mlp_forward_prepared.1} parent=0
    _
  %s6 = ssub.s32 1, %s4
  %s7 = scalar_select 0, %s6, %s4
  $region1: #{mlp_forward_prepared.1} parent=0
    #allocation3 [shape = 'u8[8192]{0}', space=vmem, size = 0x2000, scoped, tag = 'input window, operand 0, single buffered']
    #allocation4 [shape = 's32[1]{0}', space=sflag, size = 0x4, scoped, tag = 'scoped memory for mlp_forward_prepared.1']
    #allocation5 [shape = 's32[1]{0}', space=sflag, size = 0x4, scoped, tag = 'scoped memory for mlp_forward_prepared.1']
    #allocation6 [shape = 'u8[16384]{0}', space=vmem, size = 0x4000, scoped, tag = 'input window, operand 1, single buffered']
    #allocation7 [shape = 's32[1]{0}', space=sflag, size = 0x4, scoped, tag = 'scoped memory for mlp_forward_prepared.1']
    #allocation8 [shape = 'u8[32768]{0}', space=vmem, size = 0x8000, scoped, tag = 'input window, operand 2, single buffered']
    #allocation9 [shape = 'u8[8192]{0}', space=vmem, size = 0x2000, scoped, tag = 'output window, operand 0, single buffered']
    %8 = vsyncpa [#allocation4], 0
    %9 = vsyncpa [#allocation7], 0
    %10 = vsyncpa [#allocation5], 0
    // Predicated region
    $region2: #{mlp_forward_prepared.1} parent=1 // pred_check
      _
    $region3: #{mlp_forward_prepared.1} parent=1 // pred_check_branch
      %12 = sbr.rel (0) target = $region5
    $region4: #{mlp_forward_prepared.1} parent=1 // pred_region
      %s14 = ssub.s32 256, 256
      %15 = vsyncadd [#allocation4], %s14
      %s16 = sshll.u32 [#allocation3], 4
      %s17 = int_to_ptr.vmem [resolvable:$true] %s16
      %22 = dma.hbm_to_vmem [thread:$0]  %s0, 256, %s17, [#allocation4], 128, 128, 8
    $region5: #{mlp_forward_prepared.1} parent=1 // pred_fallthru
      _
    // Predicated region
    $region6: #{mlp_forward_prepared.1} parent=1 // pred_check
      _
    $region7: #{mlp_forward_prepared.1} parent=1 // pred_check_branch
      %24 = sbr.rel (0) target = $region9
    $region8: #{mlp_forward_prepared.1} parent=1 // pred_region
      %s26 = ssub.s32 512, 512
      %27 = vsyncadd [#allocation7], %s26
      %s28 = sshll.u32 [#allocation6], 4
      %s29 = int_to_ptr.vmem [resolvable:$true] %s28
      %34 = dma.hbm_to_vmem [thread:$0]  %s1, 512, %s29, [#allocation7], 128, 128, 8
    $region9: #{mlp_forward_prepared.1} parent=1 // pred_fallthru
      _
    // Predicated region
    $region10: #{mlp_forward_prepared.1} parent=1 // pred_check
      _
    $region11: #{mlp_forward_prepared.1} parent=1 // pred_check_branch
      %36 = sbr.rel (0) target = $region13
    $region12: #{mlp_forward_prepared.1} parent=1 // pred_region
      %s38 = ssub.s32 1024, 1024
      %39 = vsyncadd [#allocation7], %s38
      %s40 = sshll.u32 [#allocation8], 4
      %s41 = int_to_ptr.vmem [resolvable:$true] %s40
      %46 = dma.hbm_to_vmem [thread:$0]  %s2, 1024, %s41, [#allocation7], 128, 128, 8
    $region13: #{mlp_forward_prepared.1} parent=1 // pred_fallthru
      _
    // Predicated region
    $region14: #{mlp_forward_prepared.1} parent=1 // pred_check
      _
    $region15: #{mlp_forward_prepared.1} parent=1 // pred_check_branch
      %48 = sbr.rel (0) target = $region17
    $region16: #{mlp_forward_prepared.1} parent=1 // pred_region
      %49 = dma.done [#allocation4], 256
    $region17: #{mlp_forward_prepared.1} parent=1 // pred_fallthru
      _
    // Predicated region
    $region18: #{mlp_forward_prepared.1} parent=1 // pred_check
      _
    $region19: #{mlp_forward_prepared.1} parent=1 // pred_check_branch
      %51 = sbr.rel (0) target = $region21
    $region20: #{mlp_forward_prepared.1} parent=1 // pred_region
      %52 = dma.done [#allocation7], 512
    $region21: #{mlp_forward_prepared.1} parent=1 // pred_fallthru
      _
    // Predicated region
    $region22: #{mlp_forward_prepared.1} parent=1 // pred_check
      _
    $region23: #{mlp_forward_prepared.1} parent=1 // pred_check_branch
      %54 = sbr.rel (0) target = $region25
    $region24: #{mlp_forward_prepared.1} parent=1 // pred_region
      %55 = dma.done [#allocation7], 1024
    $region25: #{mlp_forward_prepared.1} parent=1 // pred_fallthru
      _
    %p56 = scmp.eq.s32.totalorder 0, 0
    // Predicated region
    $region26: #{mlp_forward_prepared.1} parent=1 // pred_check
      %p57 = pneg %p56
    $region27: #{mlp_forward_prepared.1} parent=1 // pred_check_branch
      %59 = sbr.rel (%p57) target = $region29
    $region28: #{mlp_forward_prepared.1} parent=1 // pred_region
      %60 = vst [vmem:[#allocation2] sm:$0xff] 0.0
      %61 = vst [vmem:[#allocation2 + $0x8] sm:$0xff] 0.0
    $region29: #{mlp_forward_prepared.1} parent=1 // pred_fallthru
      _
    %v62 = vld [vmem:[#allocation3] sm:$0xff]
    %v63 = vld [vmem:[#allocation3 + $0x8] sm:$0xff]
    %v64 = vld [vmem:[#allocation6] sm:$0xff]
    %v65 = vld [vmem:[#allocation6 + $0x8] sm:$0xff]
    %v66 = vld [vmem:[#allocation6 + $0x10] sm:$0xff]
    %v67 = vld [vmem:[#allocation6 + $0x18] sm:$0xff]
    %vm68 = vcmask 261120
    %v70 = vsel %vm68, %v62, 0
    %v73 = vsel %vm68, %v63, 0
    %75 = vmatprep.subr.mxu0 0.0
    %76 = vmatpush1.msra.mxu0 0.0
    %77 = vmatprep.subr.mxu0 0.0
    %78 = vmatpush1.msra.mxu0 0.0
    %79 = vmatprep.subr.mxu0 0.0
    %80 = vmatpush1.msra.mxu0 0.0
    %81 = vmatprep.subr.mxu0 0.0
    %82 = vmatpush1.msra.mxu0 0.0
    %83 = vmatprep.subr.mxu0 0.0
    %84 = vmatpush1.msra.mxu0 0.0
    %85 = vmatprep.subr.mxu0 0.0
    %86 = vmatpush1.msra.mxu0 0.0
    %87 = vmatprep.subr.mxu0 0.0
    %88 = vmatpush1.msra.mxu0 0.0
    %89 = vmatprep.subr.mxu0 0.0
    %90 = vmatpush1.msra.mxu0 0.0
    %91 = vmatprep.subr.mxu0 0.0
    %92 = vmatpush1.msra.mxu0 0.0
    %93 = vmatprep.subr.mxu0 0.0
    %94 = vmatpush1.msra.mxu0 0.0
    %95 = vmatprep.subr.mxu0 0.0
    %96 = vmatpush1.msra.mxu0 0.0
    %97 = vmatprep.subr.mxu0 0.0
    %98 = vmatpush1.msra.mxu0 0.0
    %99 = vmatprep.subr.mxu0 0.0
    %100 = vmatpush1.msra.mxu0 %v67
    %101 = vmatprep.subr.mxu0 0.0
    %102 = vmatpush1.msra.mxu0 %v66
    %103 = vmatprep.subr.mxu0 0.0
    %104 = vmatpush1.msra.mxu0 %v65
    %105 = vmatprep.subr.mxu0 0.0
    %106 = vmatpush1.msra.mxu0 %v64
    %107 = vmatprep.subr.mxu0 0.0
    %108 = vmatpush2.msra.mxu0 0.0
    %109 = vmatprep.subr.mxu0 0.0
    %110 = vmatpush2.msra.mxu0 0.0
    %111 = vmatprep.subr.mxu0 0.0
    %112 = vmatpush2.msra.mxu0 0.0
    %113 = vmatprep.subr.mxu0 0.0
    %114 = vmatpush2.msra.mxu0 0.0
    %115 = vmatprep.subr.mxu0 0.0
    %116 = vmatpush2.msra.mxu0 0.0
    %117 = vmatprep.subr.mxu0 0.0
    %118 = vmatpush2.msra.mxu0 0.0
    %119 = vmatprep.subr.mxu0 0.0
    %120 = vmatpush2.msra.mxu0 0.0
    %121 = vmatprep.subr.mxu0 0.0
    %122 = vmatpush2.msra.mxu0 0.0
    %123 = vmatprep.subr.mxu0 0.0
    %124 = vmatpush2.msra.mxu0 0.0
    %125 = vmatprep.subr.mxu0 0.0
    %126 = vmatpush2.msra.mxu0 0.0
    %127 = vmatprep.subr.mxu0 0.0
    %128 = vmatpush2.msra.mxu0 0.0
    %129 = vmatprep.subr.mxu0 0.0
    %130 = vmatpush2.msra.mxu0 0.0
    %131 = vmatprep.subr.mxu0 0.0
    %132 = vmatpush2.msra.mxu0 0.0
    %133 = vmatprep.subr.mxu0 0.0
    %134 = vmatpush2.msra.mxu0 0.0
    %135 = vmatprep.subr.mxu0 0.0
    %136 = vmatpush2.msra.mxu0 0.0
    %137 = vmatprep.subr.mxu0 0.0
    %138 = vmatpush2.msra.mxu0 0.0
    %139 = vmatprep.mubr.f32.mxu0 0.0
    %140 = vmatmul.mubr.f32.gmra.mxu0 %v70
    %v141 = vpop.f32.mrf.mxu0
    %v142 = vadd.f32 0.0, %v141
    %v143 = vpop.f32.mrf.mxu0
    %144 = vmatprep.mubr.f32.mxu0 0.0
    %145 = vmatmul.mubr.f32.gmra.mxu0 %v73
    %v146 = vpop.f32.mrf.mxu0
    %v147 = vadd.f32 0.0, %v146
    %v148 = vpop.f32.mrf.mxu0
    %149 = vdwg.mxu0
    %v150 = vmax.f32 %v142, 0.0
    %v151 = vmax.f32 %v147, 0.0
    %v152 = vld [vmem:[#allocation2] sm:$0xff]
    %v153 = vld [vmem:[#allocation2 + $0x8] sm:$0xff]
    %v154 = vld [vmem:[#allocation8] sm:$0xff]
    %v155 = vld [vmem:[#allocation8 + $0x8] sm:$0xff]
    %v156 = vld [vmem:[#allocation8 + $0x10] sm:$0xff]
    %v157 = vld [vmem:[#allocation8 + $0x18] sm:$0xff]
    %v158 = vld [vmem:[#allocation8 + $0x20] sm:$0xff]
    %v159 = vld [vmem:[#allocation8 + $0x28] sm:$0xff]
    %v160 = vld [vmem:[#allocation8 + $0x30] sm:$0xff]
    %v161 = vld [vmem:[#allocation8 + $0x38] sm:$0xff]
    %vm162 = vcmask 523264
    %v164 = vsel %vm162, %v150, 0
    %v167 = vsel %vm162, %v151, 0
    %169 = vmatprep.subr.mxu0 0.0
    %170 = vmatpush1.msra.mxu0 0.0
    %171 = vmatprep.subr.mxu0 0.0
    %172 = vmatpush1.msra.mxu0 0.0
    %173 = vmatprep.subr.mxu0 0.0
    %174 = vmatpush1.msra.mxu0 0.0
    %175 = vmatprep.subr.mxu0 0.0
    %176 = vmatpush1.msra.mxu0 0.0
    %177 = vmatprep.subr.mxu0 0.0
    %178 = vmatpush1.msra.mxu0 0.0
    %179 = vmatprep.subr.mxu0 0.0
    %180 = vmatpush1.msra.mxu0 0.0
    %181 = vmatprep.subr.mxu0 0.0
    %182 = vmatpush1.msra.mxu0 0.0
    %183 = vmatprep.subr.mxu0 0.0
    %184 = vmatpush1.msra.mxu0 0.0
    %185 = vmatprep.subr.mxu0 0.0
    %186 = vmatpush1.msra.mxu0 %v161
    %187 = vmatprep.subr.mxu0 0.0
    %188 = vmatpush1.msra.mxu0 %v160
    %189 = vmatprep.subr.mxu0 0.0
    %190 = vmatpush1.msra.mxu0 %v159
    %191 = vmatprep.subr.mxu0 0.0
    %192 = vmatpush1.msra.mxu0 %v158
    %193 = vmatprep.subr.mxu0 0.0
    %194 = vmatpush1.msra.mxu0 %v157
    %195 = vmatprep.subr.mxu0 0.0
    %196 = vmatpush1.msra.mxu0 %v156
    %197 = vmatprep.subr.mxu0 0.0
    %198 = vmatpush1.msra.mxu0 %v155
    %199 = vmatprep.subr.mxu0 0.0
    %200 = vmatpush1.msra.mxu0 %v154
    %201 = vmatprep.subr.mxu0 0.0
    %202 = vmatpush2.msra.mxu0 0.0
    %203 = vmatprep.subr.mxu0 0.0
    %204 = vmatpush2.msra.mxu0 0.0
    %205 = vmatprep.subr.mxu0 0.0
    %206 = vmatpush2.msra.mxu0 0.0
    %207 = vmatprep.subr.mxu0 0.0
    %208 = vmatpush2.msra.mxu0 0.0
    %209 = vmatprep.subr.mxu0 0.0
    %210 = vmatpush2.msra.mxu0 0.0
    %211 = vmatprep.subr.mxu0 0.0
    %212 = vmatpush2.msra.mxu0 0.0
    %213 = vmatprep.subr.mxu0 0.0
    %214 = vmatpush2.msra.mxu0 0.0
    %215 = vmatprep.subr.mxu0 0.0
    %216 = vmatpush2.msra.mxu0 0.0
    %217 = vmatprep.subr.mxu0 0.0
    %218 = vmatpush2.msra.mxu0 0.0
    %219 = vmatprep.subr.mxu0 0.0
    %220 = vmatpush2.msra.mxu0 0.0
    %221 = vmatprep.subr.mxu0 0.0
    %222 = vmatpush2.msra.mxu0 0.0
    %223 = vmatprep.subr.mxu0 0.0
    %224 = vmatpush2.msra.mxu0 0.0
    %225 = vmatprep.subr.mxu0 0.0
    %226 = vmatpush2.msra.mxu0 0.0
    %227 = vmatprep.subr.mxu0 0.0
    %228 = vmatpush2.msra.mxu0 0.0
    %229 = vmatprep.subr.mxu0 0.0
    %230 = vmatpush2.msra.mxu0 0.0
    %231 = vmatprep.subr.mxu0 0.0
    %232 = vmatpush2.msra.mxu0 0.0
    %233 = vmatprep.mubr.f32.mxu0 0.0
    %234 = vmatmul.mubr.f32.gmra.mxu0 %v164
    %v235 = vpop.f32.mrf.mxu0
    %v236 = vadd.f32 0.0, %v235
    %v237 = vpop.f32.mrf.mxu0
    %238 = vmatprep.mubr.f32.mxu0 0.0
    %239 = vmatmul.mubr.f32.gmra.mxu0 %v167
    %v240 = vpop.f32.mrf.mxu0
    %v241 = vadd.f32 0.0, %v240
    %v242 = vpop.f32.mrf.mxu0
    %243 = vdwg.mxu0
    %v244 = vadd.f32 %v152, %v236
    %v245 = vadd.f32 %v153, %v241
    %246 = vst [vmem:[#allocation2] sm:$0xff] %v244
    %247 = vst [vmem:[#allocation2 + $0x8] sm:$0xff] %v245
    // Predicated region
    $region30: #{mlp_forward_prepared.1} parent=1 // pred_check
      %p248 = pneg %p56
    $region31: #{mlp_forward_prepared.1} parent=1 // pred_check_branch
      %250 = sbr.rel (%p248) target = $region33
    $region32: #{mlp_forward_prepared.1} parent=1 // pred_region
      %v251 = vld [vmem:[#allocation2] sm:$0xff]
      %v252 = vld [vmem:[#allocation2 + $0x8] sm:$0xff]
      %253 = vst [vmem:[#allocation9] sm:$0xff] %v251
      %254 = vst [vmem:[#allocation9 + $0x8] sm:$0xff] %v252
    $region33: #{mlp_forward_prepared.1} parent=1 // pred_fallthru
      _
    // Predicated region
    $region34: #{mlp_forward_prepared.1} parent=1 // pred_check
      _
    $region35: #{mlp_forward_prepared.1} parent=1 // pred_check_branch
      %256 = sbr.rel (0) target = $region37
    $region36: #{mlp_forward_prepared.1} parent=1 // pred_region
      %s258 = ssub.s32 256, 256
      %259 = vsyncadd [#allocation5], %s258
      %s260 = sshll.u32 [#allocation9], 4
      %s261 = int_to_ptr.vmem [resolvable:$true] %s260
      %266 = dma.vmem_to_hbm [thread:$0]  %s261, 256, %s3, [#allocation5], 128, 128, 8
    $region37: #{mlp_forward_prepared.1} parent=1 // pred_fallthru
      _
    // Predicated region
    $region38: #{mlp_forward_prepared.1} parent=1 // pred_check
      _
    $region39: #{mlp_forward_prepared.1} parent=1 // pred_check_branch
      %268 = sbr.rel (0) target = $region41
    $region40: #{mlp_forward_prepared.1} parent=1 // pred_region
      %269 = dma.done [#allocation5], 256
    $region41: #{mlp_forward_prepared.1} parent=1 // pred_fallthru
      _
    %270 = vsyncpa [#allocation4], 1
    %271 = vsyncpa [#allocation7], 1
    %272 = vsyncpa [#allocation5], 1

</llo_original>
